<compile_context>
chip_gen: v6e
topology: v6e:2x2x1
jax: 0.10.0
libtpu: 0.0.40
codegen_flags: <defaults>
</compile_context>

<pallas_src>
import jax
import jax.numpy as jnp
import numpy as np
from jax import lax
from jax.experimental import pallas as pl
from jax.experimental.pallas import tpu as pltpu


def _vmem_capacity_bytes():
    """Per-TensorCore VMEM capacity (generation aware), conservative fallback."""
    default = 64 * 1024 * 1024          # v7x per-TC size -- safe lower bound everywhere
    try:
        info = pltpu.get_tpu_info()
        cap = int(getattr(info, "vmem_capacity_bytes", 0) or 0)
        return cap if cap > 0 else default
    except Exception:
        return default


def _pick_tq(N, C, Cq, *, budget_bytes, return_attn, attn_itemsize, use_bf16, fold_qk):
    """Largest query tile (multiple of 128 dividing N, or N itself) whose per-step
    working set fits the VMEM budget."""
    # TODO(synk): pad N to the next multiple of 128 (masking padded keys in the softmax)
    # so spatial sizes whose N has no 128-multiple divisor (e.g. 28x28 -> 784) still get
    # a bounded, pipelined query tile instead of collapsing to tq == N.
    cands = sorted({d for d in range(128, N, 128) if N % d == 0} | {N}, reverse=True)
    cbytes = 2 if use_bf16 else 4
    for tq in cands:
        need = 2 * C * N * 4                      # resident x block (double-buffered, f32)
        need += C * N * cbytes                    # in-kernel compute-dtype copy of x
        if fold_qk:
            need += 2 * (C * C + N) * 4           # Wqk + column-bias blocks
        else:
            need += 2 * 2 * Cq * N * 4            # resident proj_q / proj_k blocks
        need += 2 * C * C * 4 + C * 4             # Wv / bv
        need += 2 * C * tq * 4                    # y tile (double-buffered)
        if return_attn:
            need += 2 * tq * N * attn_itemsize    # attention slab (double-buffered)
        need += 3 * tq * N * 4                    # energy / exp / attn f32 temporaries
        need += 4 * C * tq * 4                    # g/q/z/out temporaries
        if need <= budget_bytes:
            return tq
    return cands[-1]


def _make_kernel(*, tq, n_tiles, use_bf16, fold_qk, activation):
    cdt = jnp.bfloat16 if use_bf16 else jnp.float32
    single_tile = (n_tiles == 1)

    def kernel(x_ref, p1_ref, p2_ref, wv_ref, bv_ref, gamma_ref, y_ref, *rest):
        # Blocks (leading batch dim squeezed):
        #   x_ref : (C, N)  all pixels of this batch, resident across query tiles (f32)
        #   folded:   p1_ref = Wk^T Wq (C, C),  p2_ref = column bias (1, N)
        #   unfolded: p1_ref = proj_q (Cq, N),  p2_ref = proj_k (Cq, N)
        #   wv_ref: (C, C), bv_ref: (C, 1), gamma_ref: (1, 1) scalar in SMEM
        attn_ref = rest[0] if rest else None

        x = x_ref[...]                                   # (C, N) f32 (exact residual path)
        xb = x.astype(cdt)                               # MXU-operand copy (bf16 if enabled)

        if single_tile:
            x_q = x                                      # (C, TQ) == (C, N)
        else:
            # 128-aligned dynamic slice of the resident block: no duplicate x stream.
            start = pl.multiple_of(pl.program_id(1) * tq, 128)
            x_q = x_ref[:, pl.ds(start, tq)]             # (C, TQ) f32

        if fold_qk:
            # energy[i,j] = x_i^T (Wq^T Wk) x_j + (Wk^T bq).x_j ; row-constant terms
            # cancel in the softmax.  Column bias was precomputed in the wrapper.
            g = jnp.dot(p1_ref[...].astype(cdt), x_q.astype(cdt),
                        preferred_element_type=jnp.float32)               # (C, TQ)
            energy = lax.dot_general(g.astype(cdt), xb, (((0,), (0,)), ((), ())),
                                     preferred_element_type=jnp.float32)  # (TQ, N)
            energy = energy + p2_ref[...]                                 # (1, N) broadcast
        else:
            # Unfolded path: energy = (Wq x + bq)^T (Wk x + bk), projections precomputed
            # once per batch in the wrapper -> K = Cq on the MXU instead of K = C.
            k = p2_ref[...].astype(cdt)                                   # (Cq, N)
            if single_tile:
                q = p1_ref[...].astype(cdt)                               # (Cq, TQ)
            else:
                q = p1_ref[:, pl.ds(start, tq)].astype(cdt)               # (Cq, TQ)
            energy = lax.dot_general(q, k, (((0,), (0,)), ((), ())),
                                     preferred_element_type=jnp.float32)  # (TQ, N)

        # row-wise softmax over the lane-dense key axis (EUP reciprocal for the denom)
        m = jnp.max(energy, axis=-1, keepdims=True)
        e = jnp.exp(energy - m)
        attn = e * pl.reciprocal(jnp.sum(e, axis=-1, keepdims=True), approx=True)

        # value path reassociated: out = Wv (x attn^T) + bv   (sum_j attn[i, j] == 1)
        z = lax.dot_general(xb, attn.astype(cdt), (((1,), (1,)), ((), ())),
                            preferred_element_type=jnp.float32)           # (C, TQ)
        out = jnp.dot(wv_ref[...].astype(cdt), z.astype(cdt),
                      preferred_element_type=jnp.float32) + bv_ref[...]

        y = gamma_ref[0, 0] * out + x_q
        # TODO(synk): the module takes a generic `activation`; ReLU (SAGAN default),
        # identity (None) and jnp-traceable callables are supported here.
        if activation == "relu":
            y = jnp.maximum(y, 0.0)
        elif callable(activation):
            y = activation(y)
        y_ref[...] = y.astype(y_ref.dtype)
        if attn_ref is not None:
            attn_ref[...] = attn.astype(attn_ref.dtype)

    return kernel


def self_attn_pallas(x_nchw, wq, bq, wk, bk, wv, bv, gamma, *, tq=None, use_bf16=True,
                     fold_qk=None, return_attn=True, attn_dtype=jnp.float32,
                     activation="relu"):
    """SAGAN Self_Attn forward.

    x_nchw: (B, C, W, H) f32.  Returns (activation(gamma*attn_out + x) in NCHW,
    attention (B, N, N) in `attn_dtype`, or None if return_attn=False).
    """
    B, C, W, H = x_nchw.shape
    N = W * H
    Cq = wq.shape[0]
    if fold_qk is None:
        fold_qk = C <= 128      # folded Wqk (K=C) only pays off for small C

    x_cm = x_nchw.reshape(B, C, N)          # channel-major, pure view (no transpose)

    cap = _vmem_capacity_bytes()
    budget = min(int(0.70 * cap), 100 * 1024 * 1024)
    vmem_limit = min(int(0.85 * cap), 110 * 1024 * 1024)
    attn_itemsize = jnp.dtype(attn_dtype).itemsize

    if tq is None:
        tq = _pick_tq(N, C, Cq, budget_bytes=budget, return_attn=return_attn,
                      attn_itemsize=attn_itemsize, use_bf16=use_bf16, fold_qk=fold_qk)
    assert N % tq == 0 and (tq == N or tq % 128 == 0), (N, tq)
    n_tiles = N // tq

    f32 = jnp.float32
    if fold_qk:
        p1 = (wk.T @ wq).astype(f32)                                          # (C,C)=Wk^T Wq
        p2 = jnp.einsum('c,bcn->bn', wk.T @ bq, x_cm)[:, None, :].astype(f32)  # (B,1,N)
        p1_spec = pl.BlockSpec((C, C), lambda b, t: (0, 0))
        p2_spec = pl.BlockSpec((None, 1, N), lambda b, t: (b, 0, 0))
    else:
        p1 = (jnp.einsum('qc,bcn->bqn', wq, x_cm) + bq[None, :, None]).astype(f32)
        p2 = (jnp.einsum('qc,bcn->bqn', wk, x_cm) + bk[None, :, None]).astype(f32)
        p1_spec = pl.BlockSpec((None, Cq, N), lambda b, t: (b, 0, 0))
        p2_spec = pl.BlockSpec((None, Cq, N), lambda b, t: (b, 0, 0))

    wv2 = wv.astype(f32)
    bv2 = bv.reshape(C, 1).astype(f32)
    gamma2 = jnp.asarray(gamma, f32).reshape(1, 1)

    in_specs = [
        pl.BlockSpec((None, C, N), lambda b, t: (b, 0, 0)),   # x, resident per batch
        p1_spec,
        p2_spec,
        pl.BlockSpec((C, C), lambda b, t: (0, 0)),            # Wv
        pl.BlockSpec((C, 1), lambda b, t: (0, 0)),            # bv column
        pl.BlockSpec(memory_space=pltpu.MemorySpace.SMEM),    # gamma scalar
    ]
    y_spec = pl.BlockSpec((None, C, tq), lambda b, t: (b, 0, t))
    if return_attn:
        out_shape = (jax.ShapeDtypeStruct((B, C, N), x_nchw.dtype),
                     jax.ShapeDtypeStruct((B, N, N), attn_dtype))
        out_specs = (y_spec, pl.BlockSpec((None, tq, N), lambda b, t: (b, t, 0)))
    else:
        out_shape = jax.ShapeDtypeStruct((B, C, N), x_nchw.dtype)
        out_specs = y_spec

    kernel = _make_kernel(tq=tq, n_tiles=n_tiles, use_bf16=use_bf16, fold_qk=fold_qk,
                          activation=activation)

    out = pl.pallas_call(
        kernel,
        out_shape=out_shape,
        grid_spec=pltpu.PrefetchScalarGridSpec(
            num_scalar_prefetch=0,
            grid=(B, n_tiles),
            in_specs=in_specs,
            out_specs=out_specs,
        ),
        compiler_params=pltpu.CompilerParams(
            dimension_semantics=("parallel", "parallel"),
            vmem_limit_bytes=vmem_limit,
        ),
    )(x_cm, p1, p2, wv2, bv2, gamma2)

    if return_attn:
        y_cm, attn = out
    else:
        y_cm, attn = out, None
    return y_cm.reshape(B, C, W, H), attn


def _reference(x_nchw, wq, bq, wk, bk, wv, bv, gamma):
    B, C, W, H = x_nchw.shape
    N = W * H
    xf = x_nchw.reshape(B, C, N)                                 # (B, C, N)
    q = jnp.einsum('oc,bcn->bno', wq, xf) + bq[None, None, :]    # (B, N, Cq)
    k = jnp.einsum('oc,bcn->bon', wk, xf) + bk[None, :, None]    # (B, Cq, N)
    energy = jnp.einsum('bno,bom->bnm', q, k)                    # (B, N, N)
    attn = jax.nn.softmax(energy, axis=-1)
    v = jnp.einsum('oc,bcn->bon', wv, xf) + bv[None, :, None]    # (B, C, N)
    out = jnp.einsum('bcn,bmn->bcm', v, attn)                    # (B, C, N)
    out = out.reshape(B, C, W, H)
    out = gamma * out + x_nchw
    return jnp.maximum(out, 0.0), attn


def _make_params(key, C):
    Cq = max(C // 8, 1)
    ks = jax.random.split(key, 6)
    wq = jax.random.normal(ks[0], (Cq, C), jnp.float32) * 0.1
    bq = jax.random.normal(ks[1], (Cq,), jnp.float32) * 0.1
    wk = jax.random.normal(ks[2], (Cq, C), jnp.float32) * 0.1
    bk = jax.random.normal(ks[3], (Cq,), jnp.float32) * 0.1
    wv = jax.random.normal(ks[4], (C, C), jnp.float32) * 0.1
    bv = jax.random.normal(ks[5], (C,), jnp.float32) * 0.1
    # gamma is initialized to zero in the module; nonzero so the attention path matters.
    gamma = jnp.array([0.5], jnp.float32)
    return wq, bq, wk, bk, wv, bv, gamma


if __name__ == "__main__":
    key = jax.random.PRNGKey(0)

    # Case 1: exact path (f32 MXU), folded Wqk (C <= 128), single query tile.
    B, C, W, H = 2, 16, 8, 8                     # N = 64, Cq = 2
    x1 = jax.random.normal(jax.random.fold_in(key, 1), (B, C, W, H), jnp.float32)
    p1 = _make_params(jax.random.fold_in(key, 2), C)
    y1, a1 = self_attn_pallas(x1, *p1, use_bf16=False)
    jax.block_until_ready((y1, a1))
    y1_ref, a1_ref = _reference(x1, *p1)
    np.testing.assert_allclose(np.asarray(a1), np.asarray(a1_ref), rtol=2e-3, atol=2e-3)
    np.testing.assert_allclose(np.asarray(y1), np.asarray(y1_ref), rtol=2e-3, atol=2e-3)

    # Case 2: bf16 MXU operands, unfolded q/k path, multi query tile (tq=128 < N=256),
    #         bf16 attention output.
    B, C, W, H = 2, 16, 16, 16                   # N = 256
    x2 = jax.random.normal(jax.random.fold_in(key, 3), (B, C, W, H), jnp.float32)
    p2 = _make_params(jax.random.fold_in(key, 4), C)
    y2, a2 = self_attn_pallas(x2, *p2, tq=128, use_bf16=True, fold_qk=False,
                              attn_dtype=jnp.bfloat16)
    jax.block_until_ready((y2, a2))
    y2_ref, a2_ref = _reference(x2, *p2)
    np.testing.assert_allclose(np.asarray(a2.astype(jnp.float32)), np.asarray(a2_ref),
                               rtol=5e-2, atol=5e-2)
    np.testing.assert_allclose(np.asarray(y2), np.asarray(y2_ref), rtol=5e-2, atol=5e-2)

    # Case 3: attention map not materialized (biggest HBM/VMEM saver), default tiling.
    y3, a3 = self_attn_pallas(x2, *p2, use_bf16=True, return_attn=False)
    jax.block_until_ready(y3)
    assert a3 is None
    np.testing.assert_allclose(np.asarray(y3), np.asarray(y2_ref), rtol=5e-2, atol=5e-2)

    print("KERNEL_OK")
</pallas_src>

<mosaic_0001>
module attributes {stable_mosaic.version = 11 : i64} {
  func.func @kernel(%arg0: i32, %arg1: i32, %arg2: memref<1x16x64xf32, #tpu.memory_space<vmem>>, %arg3: memref<16x16xf32, #tpu.memory_space<vmem>>, %arg4: memref<1x1x64xf32, #tpu.memory_space<vmem>>, %arg5: memref<16x16xf32, #tpu.memory_space<vmem>>, %arg6: memref<16x1xf32, #tpu.memory_space<vmem>>, %arg7: memref<1x1xf32, #tpu.memory_space<smem>>, %arg8: memref<1x16x64xf32, #tpu.memory_space<vmem>>, %arg9: memref<1x64x64xf32, #tpu.memory_space<vmem>>) attributes {dimension_semantics = [#tpu.dimension_semantics<parallel>, #tpu.dimension_semantics<parallel>], iteration_bounds = array<i64: 2, 1>, scalar_prefetch = 0 : i64, scratch_operands = 0 : i64, tpu.core_type = #tpu.core_type<tc>, window_params = [{transform_indices = @transform_0, window_bounds = array<i64: 1, 16, 64>}, {pipeline_mode = #tpu.pipeline_mode<synchronous>, transform_indices = @transform_1, window_bounds = array<i64: 16, 16>}, {transform_indices = @transform_2, window_bounds = array<i64: 1, 1, 64>}, {pipeline_mode = #tpu.pipeline_mode<synchronous>, transform_indices = @transform_3, window_bounds = array<i64: 16, 16>}, {pipeline_mode = #tpu.pipeline_mode<synchronous>, transform_indices = @transform_4, window_bounds = array<i64: 16, 1>}, {transform_indices = @transform_5, window_bounds = array<i64: 1, 1>}, {transform_indices = @transform_6, window_bounds = array<i64: 1, 16, 64>}, {transform_indices = @transform_7, window_bounds = array<i64: 1, 64, 64>}]} {
    %c0 = arith.constant 0 : index
    %c0_0 = arith.constant 0 : index
    %c0_1 = arith.constant 0 : index
    %0 = vector.load %arg2[%c0, %c0_0, %c0_1] : memref<1x16x64xf32, #tpu.memory_space<vmem>>, vector<1x16x64xf32>
    %1 = vector.shape_cast %0 : vector<1x16x64xf32> to vector<16x64xf32>
    %c0_2 = arith.constant 0 : index
    %c0_3 = arith.constant 0 : index
    %2 = vector.load %arg3[%c0_2, %c0_3] : memref<16x16xf32, #tpu.memory_space<vmem>>, vector<16x16xf32>
    %cst = arith.constant dense<0.000000e+00> : vector<16x64xf32>
    %3 = tpu.matmul %2, %1, %cst {dimension_numbers = #tpu.dot_dimension_numbers<[1], [0], [0], [1], [0, 0, 1, 1], [], []>} : vector<16x16xf32>, vector<16x64xf32>, vector<16x64xf32> -> vector<16x64xf32>
    %cst_4 = arith.constant dense<0.000000e+00> : vector<64x64xf32>
    %4 = tpu.matmul %3, %1, %cst_4 {dimension_numbers = #tpu.dot_dimension_numbers<[0], [0], [1], [1], [0, 1, 1, 1], [], []>} : vector<16x64xf32>, vector<16x64xf32>, vector<64x64xf32> -> vector<64x64xf32>
    %c0_5 = arith.constant 0 : index
    %c0_6 = arith.constant 0 : index
    %c0_7 = arith.constant 0 : index
    %5 = vector.load %arg4[%c0_5, %c0_6, %c0_7] : memref<1x1x64xf32, #tpu.memory_space<vmem>>, vector<1x1x64xf32>
    %6 = vector.shape_cast %5 : vector<1x1x64xf32> to vector<1x64xf32>
    %7 = vector.broadcast %6 : vector<1x64xf32> to vector<64x64xf32>
    %8 = arith.addf %4, %7 : vector<64x64xf32>
    %cst_8 = arith.constant dense<0xFF800000> : vector<64xf32>
    %9 = vector.multi_reduction <maximumf>, %8, %cst_8 [1] : vector<64x64xf32> to vector<64xf32>
    %10 = vector.shape_cast %9 : vector<64xf32> to vector<64x1xf32>
    %11 = vector.broadcast %10 : vector<64x1xf32> to vector<64x64xf32>
    %12 = arith.subf %8, %11 : vector<64x64xf32>
    %13 = math.exp %12 : vector<64x64xf32>
    %cst_9 = arith.constant dense<0.000000e+00> : vector<64xf32>
    %14 = vector.multi_reduction <add>, %13, %cst_9 [1] : vector<64x64xf32> to vector<64xf32>
    %15 = vector.shape_cast %14 : vector<64xf32> to vector<64x1xf32>
    %16 = tpu.reciprocal %15 {approx = true} : vector<64x1xf32> -> vector<64x1xf32>
    %17 = vector.broadcast %16 : vector<64x1xf32> to vector<64x64xf32>
    %18 = arith.mulf %13, %17 : vector<64x64xf32>
    %cst_10 = arith.constant dense<0.000000e+00> : vector<16x64xf32>
    %19 = tpu.matmul %1, %18, %cst_10 {dimension_numbers = #tpu.dot_dimension_numbers<[1], [1], [0], [0], [0, 0, 1, 0], [], []>} : vector<16x64xf32>, vector<64x64xf32>, vector<16x64xf32> -> vector<16x64xf32>
    %c0_11 = arith.constant 0 : index
    %c0_12 = arith.constant 0 : index
    %20 = vector.load %arg5[%c0_11, %c0_12] : memref<16x16xf32, #tpu.memory_space<vmem>>, vector<16x16xf32>
    %cst_13 = arith.constant dense<0.000000e+00> : vector<16x64xf32>
    %21 = tpu.matmul %20, %19, %cst_13 {dimension_numbers = #tpu.dot_dimension_numbers<[1], [0], [0], [1], [0, 0, 1, 1], [], []>} : vector<16x16xf32>, vector<16x64xf32>, vector<16x64xf32> -> vector<16x64xf32>
    %c0_14 = arith.constant 0 : index
    %c0_15 = arith.constant 0 : index
    %22 = vector.load %arg6[%c0_14, %c0_15] : memref<16x1xf32, #tpu.memory_space<vmem>>, vector<16x1xf32>
    %23 = vector.broadcast %22 : vector<16x1xf32> to vector<16x64xf32>
    %24 = arith.addf %21, %23 : vector<16x64xf32>
    %c0_16 = arith.constant 0 : index
    %c0_17 = arith.constant 0 : index
    %25 = memref.load %arg7[%c0_16, %c0_17] : memref<1x1xf32, #tpu.memory_space<smem>>
    %26 = vector.broadcast %25 : f32 to vector<16x64xf32>
    %27 = arith.mulf %26, %24 : vector<16x64xf32>
    %28 = arith.addf %27, %1 : vector<16x64xf32>
    %cst_18 = arith.constant 0.000000e+00 : f32
    %29 = vector.broadcast %cst_18 : f32 to vector<16x64xf32>
    %30 = arith.maximumf %28, %29 : vector<16x64xf32>
    %c0_19 = arith.constant 0 : index
    %c0_20 = arith.constant 0 : index
    %c0_21 = arith.constant 0 : index
    %31 = vector.load %arg8[%c0_19, %c0_20, %c0_21] : memref<1x16x64xf32, #tpu.memory_space<vmem>>, vector<1x16x64xf32>
    %32 = vector.shape_cast %31 : vector<1x16x64xf32> to vector<16x64xf32>
    %33 = vector.shape_cast %30 : vector<16x64xf32> to vector<1x16x64xf32>
    tpu.vector_store %arg8[%c0_19, %c0_20, %c0_21], %33 {strides = array<i32>} : memref<1x16x64xf32, #tpu.memory_space<vmem>>, vector<1x16x64xf32>,
    %c0_22 = arith.constant 0 : index
    %c0_23 = arith.constant 0 : index
    %c0_24 = arith.constant 0 : index
    %34 = vector.load %arg9[%c0_22, %c0_23, %c0_24] : memref<1x64x64xf32, #tpu.memory_space<vmem>>, vector<1x64x64xf32>
    %35 = vector.shape_cast %34 : vector<1x64x64xf32> to vector<64x64xf32>
    %36 = vector.shape_cast %18 : vector<64x64xf32> to vector<1x64x64xf32>
    tpu.vector_store %arg9[%c0_22, %c0_23, %c0_24], %36 {strides = array<i32>} : memref<1x64x64xf32, #tpu.memory_space<vmem>>, vector<1x64x64xf32>,
    return
  }
  func.func @transform_0(%arg0: i32, %arg1: i32) -> (i32, i32, i32) {
    %c0_i32 = arith.constant 0 : i32
    %c0_i32_0 = arith.constant 0 : i32
    %c0_i32_1 = arith.constant 0 : i32
    return %arg0, %c0_i32, %c0_i32_0 : i32, i32, i32
  }
  func.func @transform_1(%arg0: i32, %arg1: i32) -> (i32, i32) {
    %c0_i32 = arith.constant 0 : i32
    %c0_i32_0 = arith.constant 0 : i32
    %c0_i32_1 = arith.constant 0 : i32
    return %c0_i32, %c0_i32_0 : i32, i32
  }
  func.func @transform_2(%arg0: i32, %arg1: i32) -> (i32, i32, i32) {
    %c0_i32 = arith.constant 0 : i32
    %c0_i32_0 = arith.constant 0 : i32
    %c0_i32_1 = arith.constant 0 : i32
    return %arg0, %c0_i32, %c0_i32_0 : i32, i32, i32
  }
  func.func @transform_3(%arg0: i32, %arg1: i32) -> (i32, i32) {
    %c0_i32 = arith.constant 0 : i32
    %c0_i32_0 = arith.constant 0 : i32
    %c0_i32_1 = arith.constant 0 : i32
    return %c0_i32, %c0_i32_0 : i32, i32
  }
  func.func @transform_4(%arg0: i32, %arg1: i32) -> (i32, i32) {
    %c0_i32 = arith.constant 0 : i32
    %c0_i32_0 = arith.constant 0 : i32
    %c0_i32_1 = arith.constant 0 : i32
    return %c0_i32, %c0_i32_0 : i32, i32
  }
  func.func @transform_5(%arg0: i32, %arg1: i32) -> (i32, i32) {
    %c0_i32 = arith.constant 0 : i32
    %c0_i32_0 = arith.constant 0 : i32
    %c0_i32_1 = arith.constant 0 : i32
    return %c0_i32, %c0_i32_0 : i32, i32
  }
  func.func @transform_6(%arg0: i32, %arg1: i32) -> (i32, i32, i32) {
    %c0_i32 = arith.constant 0 : i32
    %c0_i32_0 = arith.constant 0 : i32
    return %arg0, %c0_i32, %arg1 : i32, i32, i32
  }
  func.func @transform_7(%arg0: i32, %arg1: i32) -> (i32, i32, i32) {
    %c0_i32 = arith.constant 0 : i32
    %c0_i32_0 = arith.constant 0 : i32
    return %arg0, %arg1, %c0_i32 : i32, i32, i32
  }
}

</mosaic_0001>

<llo_original>
// kernel: tpu_custom_call.1
$region0: #{tpu_custom_call.1}
  #allocation0 [shape = 'u32[]', space=smem, size = 0x4, offset = 0x4, fixed_abs, tag = 'smem constant byte address 0x4 - core index']
  #allocation1 [shape = 'u32[144,128]{1,0:T(1,128)}', space=vmem, size = 0x12000, scoped, tag = 'internal scratch']
  #allocation2 [shape = 'f32[1,1]{1,0:T(1,128)S(6)}', space=smem, size = 0x200, scoped, tag = 'scoped memory for tpu_custom_call.1']
  %s0 = inlined_call_operand.hbm [shape: f32[2,16,64], index: 0, kind: input, shape index: {}]
  %s1 = inlined_call_operand.vmem [shape: f32[16,16], index: 1, kind: input, shape index: {}]
  %s2 = inlined_call_operand.vmem [shape: f32[2,1,64], index: 2, kind: input, shape index: {}]
  %s3 = inlined_call_operand.hbm [shape: f32[16,16], index: 3, kind: input, shape index: {}]
  %s4 = inlined_call_operand.vmem [shape: f32[16,1], index: 4, kind: input, shape index: {}]
  %s5 = inlined_call_operand.<no memory space> [shape: f32[1,1], index: 5, kind: input, shape index: {}]
  %s6 = inlined_call_operand.hbm [shape: f32[2,16,64], index: 6, kind: output, shape index: {0}]
  %s7 = inlined_call_operand.hbm [shape: f32[2,64,64], index: 7, kind: output, shape index: {1}]
  %8 = xla_tuple %s6, %s7
  %s9 = sld [smem:[#allocation0]]
  $region73: #{tpu_custom_call.1} parent=0
    _
  %s11 = ssub.s32 1, %s9
  %s12 = scalar_select 0, %s11, %s9
  %13 = sst [smem:[#allocation2]] %s5
  $region1: #{tpu_custom_call.1} parent=0
    #allocation3 [shape = 'u8[16384]{0}', space=vmem, size = 0x4000, scoped, tag = 'input window, operand 0']
    #allocation4 [shape = 's32[2]{0}', space=sflag, size = 0x8, scoped, tag = 'scoped memory for tpu_custom_call.1']
    #allocation5 [shape = 's32[2]{0}', space=sflag, size = 0x8, scoped, tag = 'scoped memory for tpu_custom_call.1']
    #allocation6 [shape = 'u8[8192]{0}', space=vmem, size = 0x2000, scoped, tag = 'input window, operand 3, single buffered']
    #allocation7 [shape = 's32[1]{0}', space=sflag, size = 0x4, scoped, tag = 'scoped memory for tpu_custom_call.1']
    #allocation8 [shape = 'u8[16384]{0}', space=vmem, size = 0x4000, scoped, tag = 'output window, operand 0']
    #allocation9 [shape = 'u8[65536]{0}', space=vmem, size = 0x10000, scoped, tag = 'output window, operand 1']
    #allocation10 [shape = 's32[2]{0}', space=sflag, size = 0x8, scoped, tag = 'scoped memory for tpu_custom_call.1']
    %14 = vsyncpa [#allocation4], 0
    %s15 = scalar_lea.sflag [#allocation4], 1
    %16 = vsyncpa %s15, 0
    %17 = vsyncpa [#allocation7], 0
    %18 = vsyncpa [#allocation5], 0
    %s19 = scalar_lea.sflag [#allocation5], 1
    %20 = vsyncpa %s19, 0
    %21 = vsyncpa [#allocation10], 0
    %s22 = scalar_lea.sflag [#allocation10], 1
    %23 = vsyncpa %s22, 0
    loop: start=0, step=1, limit=4
    $region2: #{tpu_custom_call.1} parent=1 // loop_pre_header
      _
    $region3: #{tpu_custom_call.1} parent=1 // loop_header
      %s25 = sphi 0, %s29
      %p26 = scmp.ge.s32.totalorder %s25, 4
      %s32 = sphi 0, %s44
      %s33 = sphi 0, %s40
      %s34 = sphi 0, %s32
      %s35 = sphi 0, %s33
      %s36 = sphi 0, %s34
      %s37 = sphi 0, %s35
      %s47 = sphi 0, %s49
      %s50 = sphi 0, %s47
      %s51 = sphi 0, %s50
      %s67 = sphi 0, %s51
      %s71 = sphi 0, %s71
      %s73 = sphi 0, %s71
      %s74 = sphi 0, %s73
      %s88 = sphi 0, %s74
      %s94 = sphi 0, %s96
      %s97 = sphi 0, %s94
      %s98 = sphi 0, %s97
      %s114 = sphi 0, %s98
      %s118 = sphi 0, %s118
      %s120 = sphi 0, %s118
      %s121 = sphi 0, %s120
      %s135 = sphi 0, %s121
      %s139 = sphi 0, %s139
      %s141 = sphi 0, %s139
      %s142 = sphi 0, %s141
      %s156 = sphi 0, %s142
      %s160 = sphi 0, %s160
      %s162 = sphi 0, %s160
      %s163 = sphi 0, %s162
      %s177 = sphi 0, %s163
      %s185 = sphi 0, %s187
      %s188 = sphi 0, %s185
      %s189 = sphi 0, %s188
      %s205 = sphi 0, %s189
      %s213 = sphi 0, %s215
      %s216 = sphi 0, %s213
      %s217 = sphi 0, %s216
      %s233 = sphi 0, %s217
    $region4: #{tpu_custom_call.1} parent=1 // loop_header_branch
      %28 = sbr.rel (%p26) target = $region8
    $region5: #{tpu_custom_call.1} parent=1 // loop_body
      %s30 = ssub.s32 %s25, 1
      %s31 = ssub.s32 %s25, 2
      %s38 = sadd.s32 1, %s33
      %p39 = scmp.ge.s32.totalorder %s38, 1
      %s40 = scalar_select %p39, 0, %s38
      %s41 = sadd.s32 1, %s32
      %s42 = scalar_select %p39, %s41, %s32
      %p43 = scmp.ge.s32.totalorder %s42, 2
      %s44 = scalar_select %p43, 0, %s42
      %s45 = ssub.s32 %s32, %s44
      %p46 = scmp.eq.s32.totalorder %s45, 0
      %s48 = sadd.s32 %s47, 1
      %s49 = scalar_select %p46, %s47, %s48
      %p52 = pneg %p46
      %p53 = scmp.eq.s32.totalorder %s25, 1
      %p54 = por %p52, %p53
      %p55 = scmp.ne.s32.totalorder %s47, %s50
      %p56 = scmp.eq.s32.totalorder %s25, 0
      %p57 = por %p55, %p56
      %p58 = scmp.ne.s32.totalorder %s47, %s50
      %p59 = scmp.eq.s32.totalorder %s30, 1
      %p60 = por %p58, %p59
      %p61 = scmp.ne.s32.totalorder %s50, %s51
      %p62 = scmp.eq.s32.totalorder %s30, 0
      %p63 = por %p61, %p62
      %p64 = scmp.ne.s32.totalorder %s50, %s51
      %p65 = scmp.eq.s32.totalorder %s31, 1
      %p66 = por %p64, %p65
      %p68 = scmp.ne.s32.totalorder %s51, %s67
      %p69 = scmp.eq.s32.totalorder %s31, 0
      %p70 = por %p68, %p69
      %s72 = sadd.s32 %s71, 1
      %p75 = scmp.eq.s32.totalorder %s25, 1
      %p76 = scmp.ne.s32.totalorder %s71, %s73
      %p77 = scmp.eq.s32.totalorder %s25, 0
      %p78 = por %p76, %p77
      %p79 = scmp.ne.s32.totalorder %s71, %s73
      %p80 = scmp.eq.s32.totalorder %s30, 1
      %p81 = por %p79, %p80
      %p82 = scmp.ne.s32.totalorder %s73, %s74
      %p83 = scmp.eq.s32.totalorder %s30, 0
      %p84 = por %p82, %p83
      %p85 = scmp.ne.s32.totalorder %s73, %s74
      %p86 = scmp.eq.s32.totalorder %s31, 1
      %p87 = por %p85, %p86
      %p89 = scmp.ne.s32.totalorder %s74, %s88
      %p90 = scmp.eq.s32.totalorder %s31, 0
      %p91 = por %p89, %p90
      %s92 = ssub.s32 %s32, %s44
      %p93 = scmp.eq.s32.totalorder %s92, 0
      %s95 = sadd.s32 %s94, 1
      %s96 = scalar_select %p93, %s94, %s95
      %p99 = pneg %p93
      %p100 = scmp.eq.s32.totalorder %s25, 1
      %p101 = por %p99, %p100
      %p102 = scmp.ne.s32.totalorder %s94, %s97
      %p103 = scmp.eq.s32.totalorder %s25, 0
      %p104 = por %p102, %p103
      %p105 = scmp.ne.s32.totalorder %s94, %s97
      %p106 = scmp.eq.s32.totalorder %s30, 1
      %p107 = por %p105, %p106
      %p108 = scmp.ne.s32.totalorder %s97, %s98
      %p109 = scmp.eq.s32.totalorder %s30, 0
      %p110 = por %p108, %p109
      %p111 = scmp.ne.s32.totalorder %s97, %s98
      %p112 = scmp.eq.s32.totalorder %s31, 1
      %p113 = por %p111, %p112
      %p115 = scmp.ne.s32.totalorder %s98, %s114
      %p116 = scmp.eq.s32.totalorder %s31, 0
      %p117 = por %p115, %p116
      %s119 = sadd.s32 %s118, 1
      %p122 = scmp.eq.s32.totalorder %s25, 1
      %p123 = scmp.ne.s32.totalorder %s118, %s120
      %p124 = scmp.eq.s32.totalorder %s25, 0
      %p125 = por %p123, %p124
      %p126 = scmp.ne.s32.totalorder %s118, %s120
      %p127 = scmp.eq.s32.totalorder %s30, 1
      %p128 = por %p126, %p127
      %p129 = scmp.ne.s32.totalorder %s120, %s121
      %p130 = scmp.eq.s32.totalorder %s30, 0
      %p131 = por %p129, %p130
      %p132 = scmp.ne.s32.totalorder %s120, %s121
      %p133 = scmp.eq.s32.totalorder %s31, 1
      %p134 = por %p132, %p133
      %p136 = scmp.ne.s32.totalorder %s121, %s135
      %p137 = scmp.eq.s32.totalorder %s31, 0
      %p138 = por %p136, %p137
      %s140 = sadd.s32 %s139, 1
      %p143 = scmp.eq.s32.totalorder %s25, 1
      %p144 = scmp.ne.s32.totalorder %s139, %s141
      %p145 = scmp.eq.s32.totalorder %s25, 0
      %p146 = por %p144, %p145
      %p147 = scmp.ne.s32.totalorder %s139, %s141
      %p148 = scmp.eq.s32.totalorder %s30, 1
      %p149 = por %p147, %p148
      %p150 = scmp.ne.s32.totalorder %s141, %s142
      %p151 = scmp.eq.s32.totalorder %s30, 0
      %p152 = por %p150, %p151
      %p153 = scmp.ne.s32.totalorder %s141, %s142
      %p154 = scmp.eq.s32.totalorder %s31, 1
      %p155 = por %p153, %p154
      %p157 = scmp.ne.s32.totalorder %s142, %s156
      %p158 = scmp.eq.s32.totalorder %s31, 0
      %p159 = por %p157, %p158
      %s161 = sadd.s32 %s160, 1
      %p164 = scmp.eq.s32.totalorder %s25, 1
      %p165 = scmp.ne.s32.totalorder %s160, %s162
      %p166 = scmp.eq.s32.totalorder %s25, 0
      %p167 = por %p165, %p166
      %p168 = scmp.ne.s32.totalorder %s160, %s162
      %p169 = scmp.eq.s32.totalorder %s30, 1
      %p170 = por %p168, %p169
      %p171 = scmp.ne.s32.totalorder %s162, %s163
      %p172 = scmp.eq.s32.totalorder %s30, 0
      %p173 = por %p171, %p172
      %p174 = scmp.ne.s32.totalorder %s162, %s163
      %p175 = scmp.eq.s32.totalorder %s31, 1
      %p176 = por %p174, %p175
      %p178 = scmp.ne.s32.totalorder %s163, %s177
      %p179 = scmp.eq.s32.totalorder %s31, 0
      %p180 = por %p178, %p179
      %s181 = ssub.s32 %s32, %s44
      %s182 = ssub.s32 %s33, %s40
      %s183 = sor.u32 %s181, %s182
      %p184 = scmp.eq.s32.totalorder %s183, 0
      %s186 = sadd.s32 %s185, 1
      %s187 = scalar_select %p184, %s185, %s186
      %p190 = pneg %p184
      %p191 = scmp.eq.s32.totalorder %s25, 1
      %p192 = por %p190, %p191
      %p193 = scmp.ne.s32.totalorder %s185, %s188
      %p194 = scmp.eq.s32.totalorder %s25, 0
      %p195 = por %p193, %p194
      %p196 = scmp.ne.s32.totalorder %s185, %s188
      %p197 = scmp.eq.s32.totalorder %s30, 1
      %p198 = por %p196, %p197
      %p199 = scmp.ne.s32.totalorder %s188, %s189
      %p200 = scmp.eq.s32.totalorder %s30, 0
      %p201 = por %p199, %p200
      %p202 = scmp.ne.s32.totalorder %s188, %s189
      %p203 = scmp.eq.s32.totalorder %s31, 1
      %p204 = por %p202, %p203
      %p206 = scmp.ne.s32.totalorder %s189, %s205
      %p207 = scmp.eq.s32.totalorder %s31, 0
      %p208 = por %p206, %p207
      %s209 = ssub.s32 %s32, %s44
      %s210 = ssub.s32 %s33, %s40
      %s211 = sor.u32 %s209, %s210
      %p212 = scmp.eq.s32.totalorder %s211, 0
      %s214 = sadd.s32 %s213, 1
      %s215 = scalar_select %p212, %s213, %s214
      %p218 = pneg %p212
      %p219 = scmp.eq.s32.totalorder %s25, 1
      %p220 = por %p218, %p219
      %p221 = scmp.ne.s32.totalorder %s213, %s216
      %p222 = scmp.eq.s32.totalorder %s25, 0
      %p223 = por %p221, %p222
      %p224 = scmp.ne.s32.totalorder %s213, %s216
      %p225 = scmp.eq.s32.totalorder %s30, 1
      %p226 = por %p224, %p225
      %p227 = scmp.ne.s32.totalorder %s216, %s217
      %p228 = scmp.eq.s32.totalorder %s30, 0
      %p229 = por %p227, %p228
      %p230 = scmp.ne.s32.totalorder %s216, %s217
      %p231 = scmp.eq.s32.totalorder %s31, 1
      %p232 = por %p230, %p231
      %p234 = scmp.ne.s32.totalorder %s217, %s233
      %p235 = scmp.eq.s32.totalorder %s31, 0
      %p236 = por %p234, %p235
      %p237 = scmp.le.s32.totalorder 1, %s25
      %p238 = scmp.lt.s32.totalorder %s25, 3
      %p239 = pnand %p237, %p238
      %p240 = pneg %p239
      // Predicated region
      $region9: #{tpu_custom_call.1} parent=5 // pred_check
        _
      $region10: #{tpu_custom_call.1} parent=5 // pred_check_branch
        %242 = sbr.rel (%p239) target = $region12
      $region11: #{tpu_custom_call.1} parent=5 // pred_region
        %s243 = ssub.s32 %s25, 1
        // Predicated region
        $region13: #{tpu_custom_call.1} parent=11 // pred_check
          %p244 = pneg %p84
        $region14: #{tpu_custom_call.1} parent=11 // pred_check_branch
          %246 = sbr.rel (%p244) target = $region16
        $region15: #{tpu_custom_call.1} parent=11 // pred_region
          _
        $region16: #{tpu_custom_call.1} parent=11 // pred_fallthru
          _
        // Predicated region
        $region17: #{tpu_custom_call.1} parent=11 // pred_check
          %p247 = pneg %p131
        $region18: #{tpu_custom_call.1} parent=11 // pred_check_branch
          %249 = sbr.rel (%p247) target = $region20
        $region19: #{tpu_custom_call.1} parent=11 // pred_region
          %s251 = ssub.s32 256, 256
          %252 = vsyncadd [#allocation7], %s251
          %s253 = sshll.u32 [#allocation6], 4
          %s254 = int_to_ptr.vmem [resolvable:$true] %s253
          %259 = dma.hbm_to_vmem [thread:$0]  %s3, 256, %s254, [#allocation7], 128, 128, 8
        $region20: #{tpu_custom_call.1} parent=11 // pred_fallthru
          _
        // Predicated region
        $region21: #{tpu_custom_call.1} parent=11 // pred_check
          %p260 = pneg %p152
        $region22: #{tpu_custom_call.1} parent=11 // pred_check_branch
          %262 = sbr.rel (%p260) target = $region24
        $region23: #{tpu_custom_call.1} parent=11 // pred_region
          _
        $region24: #{tpu_custom_call.1} parent=11 // pred_fallthru
          _
        // Predicated region
        $region25: #{tpu_custom_call.1} parent=11 // pred_check
          %p263 = pneg %p173
        $region26: #{tpu_custom_call.1} parent=11 // pred_check_branch
          %265 = sbr.rel (%p263) target = $region28
        $region27: #{tpu_custom_call.1} parent=11 // pred_region
          _
        $region28: #{tpu_custom_call.1} parent=11 // pred_fallthru
          _
      $region12: #{tpu_custom_call.1} parent=5 // pred_fallthru
        _
      %p266 = scmp.lt.s32.totalorder %s25, 2
      // Predicated region
      $region29: #{tpu_custom_call.1} parent=5 // pred_check
        %p267 = pneg %p266
      $region30: #{tpu_custom_call.1} parent=5 // pred_check_branch
        %269 = sbr.rel (%p267) target = $region32
      $region31: #{tpu_custom_call.1} parent=5 // pred_region
        // Predicated region
        $region33: #{tpu_custom_call.1} parent=31 // pred_check
          %p270 = pneg %p57
        $region34: #{tpu_custom_call.1} parent=31 // pred_check_branch
          %272 = sbr.rel (%p270) target = $region36
        $region35: #{tpu_custom_call.1} parent=31 // pred_region
          %s273 = sand.u32 %s47, 1
          %s274 = scalar_lea.sflag [#allocation4], %s273
          %s275 = sand.u32 %s47, 1
          %s276 = smul.addr %s275, 16
          %s277 = scalar_lea.vmem [#allocation3], %s276
          %s279 = ssub.s32 256, 256
          %280 = vsyncadd %s274, %s279
          %s281 = smul.addr %s32, 2
          %s282 = smul.addr %s281, 128
          %s283 = scalar_lea.hbm %s0, %s282
          %s284 = sshll.u32 %s277, 4
          %s285 = int_to_ptr.vmem [resolvable:$true] %s284
          %290 = dma.hbm_to_vmem [thread:$0]  %s283, 256, %s285, %s274, 128, 128, 8
        $region36: #{tpu_custom_call.1} parent=31 // pred_fallthru
          _
        // Predicated region
        $region37: #{tpu_custom_call.1} parent=31 // pred_check
          %p291 = pneg %p104
        $region38: #{tpu_custom_call.1} parent=31 // pred_check_branch
          %293 = sbr.rel (%p291) target = $region40
        $region39: #{tpu_custom_call.1} parent=31 // pred_region
          %p294 = scmp.lt.s32.totalorder %s32, 1
          %s295 = scalar_select %p294, %s32, 1
          %s296 = scalar_lea.vmem %s2, %s295
        $region40: #{tpu_custom_call.1} parent=31 // pred_fallthru
          _
      $region32: #{tpu_custom_call.1} parent=5 // pred_fallthru
        _
      %p297 = scmp.le.s32.totalorder 1, %s25
      %p298 = scmp.lt.s32.totalorder %s25, 3
      %p299 = pnand %p297, %p298
      %p300 = pneg %p299
      // Predicated region
      $region41: #{tpu_custom_call.1} parent=5 // pred_check
        _
      $region42: #{tpu_custom_call.1} parent=5 // pred_check_branch
        %302 = sbr.rel (%p299) target = $region44
      $region43: #{tpu_custom_call.1} parent=5 // pred_region
        %s303 = ssub.s32 %s25, 1
        %s304 = sand.u32 %s50, 1
        %s305 = scalar_lea.sflag [#allocation4], %s304
        %s306 = sand.u32 %s50, 1
        %s307 = smul.addr %s306, 16
        %s308 = scalar_lea.vmem [#allocation3], %s307
        // Predicated region
        $region45: #{tpu_custom_call.1} parent=43 // pred_check
          %p309 = pneg %p63
        $region46: #{tpu_custom_call.1} parent=43 // pred_check_branch
          %311 = sbr.rel (%p309) target = $region48
        $region47: #{tpu_custom_call.1} parent=43 // pred_region
          %312 = dma.done %s305, 256
        $region48: #{tpu_custom_call.1} parent=43 // pred_fallthru
          _
        // Predicated region
        $region49: #{tpu_custom_call.1} parent=43 // pred_check
          %p313 = pneg %p131
        $region50: #{tpu_custom_call.1} parent=43 // pred_check_branch
          %315 = sbr.rel (%p313) target = $region52
        $region51: #{tpu_custom_call.1} parent=43 // pred_region
          %316 = dma.done [#allocation7], 256
        $region52: #{tpu_custom_call.1} parent=43 // pred_fallthru
          _
        %s317 = sand.u32 %s50, 1
        %s318 = scalar_lea.sflag [#allocation4], %s317
        %s319 = sand.u32 %s50, 1
        %s320 = smul.addr %s319, 16
        %s321 = scalar_lea.vmem [#allocation3], %s320
        %p322 = pneg %p63
        %p323 = pneg %p60
        %p324 = pneg %p84
        %p325 = pneg %p81
        %p326 = scmp.lt.s32.totalorder %s34, 1
        %s327 = scalar_select %p326, %s34, 1
        %s328 = scalar_lea.vmem %s2, %s327
        %p329 = pneg %p110
        %p330 = pneg %p107
        %p331 = pneg %p131
        %p332 = pneg %p128
        %p333 = pneg %p152
        %p334 = pneg %p149
        %p335 = pneg %p173
        %p336 = pneg %p170
        %p337 = pneg %p201
        %p338 = pneg %p198
        %s339 = sand.u32 %s188, 1
        %s340 = scalar_lea.sflag [#allocation5], %s339
        %s341 = sand.u32 %s188, 1
        %s342 = smul.addr %s341, 16
        %s343 = scalar_lea.vmem [#allocation8], %s342
        %p344 = pneg %p229
        %p345 = pneg %p226
        %s346 = sand.u32 %s216, 1
        %s347 = scalar_lea.sflag [#allocation10], %s346
        %s348 = sand.u32 %s216, 1
        %s349 = smul.addr %s348, 64
        %s350 = scalar_lea.vmem [#allocation9], %s349
        %p351 = scmp.lt.s32.totalorder %s34, 1
        %s352 = scalar_select %p351, %s34, 1
        %s353 = scalar_lea.vmem %s2, %s352
        %s354 = smul.u32 8, %s35
        %v355 = vld [vmem:[%s308] sm:$0xff]
        %v356 = vld [vmem:[%s308 + $0x8] sm:$0xff]
        %v357 = vld [vmem:[%s1] sm:$0xff]
        %v358 = vld [vmem:[%s1 + $0x8] sm:$0xff]
        %vm359 = vcmask 130048
        %v361 = vsel %vm359, %v357, 0
        %v364 = vsel %vm359, %v358, 0
        %366 = vmatprep.subr.mxu0 0.0
        %367 = vmatpush1.msra.mxu0 0.0
        %368 = vmatprep.subr.mxu0 0.0
        %369 = vmatpush1.msra.mxu0 0.0
        %370 = vmatprep.subr.mxu0 0.0
        %371 = vmatpush1.msra.mxu0 0.0
        %372 = vmatprep.subr.mxu0 0.0
        %373 = vmatpush1.msra.mxu0 0.0
        %374 = vmatprep.subr.mxu0 0.0
        %375 = vmatpush1.msra.mxu0 0.0
        %376 = vmatprep.subr.mxu0 0.0
        %377 = vmatpush1.msra.mxu0 0.0
        %378 = vmatprep.subr.mxu0 0.0
        %379 = vmatpush1.msra.mxu0 0.0
        %380 = vmatprep.subr.mxu0 0.0
        %381 = vmatpush1.msra.mxu0 0.0
        %382 = vmatprep.subr.mxu0 0.0
        %383 = vmatpush1.msra.mxu0 0.0
        %384 = vmatprep.subr.mxu0 0.0
        %385 = vmatpush1.msra.mxu0 0.0
        %386 = vmatprep.subr.mxu0 0.0
        %387 = vmatpush1.msra.mxu0 0.0
        %388 = vmatprep.subr.mxu0 0.0
        %389 = vmatpush1.msra.mxu0 0.0
        %390 = vmatprep.subr.mxu0 0.0
        %391 = vmatpush1.msra.mxu0 0.0
        %392 = vmatprep.subr.mxu0 0.0
        %393 = vmatpush1.msra.mxu0 0.0
        %394 = vmatprep.subr.mxu0 0.0
        %395 = vmatpush1.msra.mxu0 %v356
        %396 = vmatprep.subr.mxu0 0.0
        %397 = vmatpush1.msra.mxu0 %v355
        %398 = vmatprep.subr.mxu0 0.0
        %399 = vmatpush2.msra.mxu0 0.0
        %400 = vmatprep.subr.mxu0 0.0
        %401 = vmatpush2.msra.mxu0 0.0
        %402 = vmatprep.subr.mxu0 0.0
        %403 = vmatpush2.msra.mxu0 0.0
        %404 = vmatprep.subr.mxu0 0.0
        %405 = vmatpush2.msra.mxu0 0.0
        %406 = vmatprep.subr.mxu0 0.0
        %407 = vmatpush2.msra.mxu0 0.0
        %408 = vmatprep.subr.mxu0 0.0
        %409 = vmatpush2.msra.mxu0 0.0
        %410 = vmatprep.subr.mxu0 0.0
        %411 = vmatpush2.msra.mxu0 0.0
        %412 = vmatprep.subr.mxu0 0.0
        %413 = vmatpush2.msra.mxu0 0.0
        %414 = vmatprep.subr.mxu0 0.0
        %415 = vmatpush2.msra.mxu0 0.0
        %416 = vmatprep.subr.mxu0 0.0
        %417 = vmatpush2.msra.mxu0 0.0
        %418 = vmatprep.subr.mxu0 0.0
        %419 = vmatpush2.msra.mxu0 0.0
        %420 = vmatprep.subr.mxu0 0.0
        %421 = vmatpush2.msra.mxu0 0.0
        %422 = vmatprep.subr.mxu0 0.0
        %423 = vmatpush2.msra.mxu0 0.0
        %424 = vmatprep.subr.mxu0 0.0
        %425 = vmatpush2.msra.mxu0 0.0
        %426 = vmatprep.subr.mxu0 0.0
        %427 = vmatpush2.msra.mxu0 0.0
        %428 = vmatprep.subr.mxu0 0.0
        %429 = vmatpush2.msra.mxu0 0.0
        %430 = vmatprep.mubr.f32.mxu0 0.0
        %431 = vmatmul.mubr.f32.gmra.mxu0 %v361
        %v432 = vpop.f32.mrf.mxu0
        %v433 = vadd.f32 0.0, %v432
        %v434 = vpop.f32.mrf.mxu0
        %435 = vmatprep.mubr.f32.mxu0 0.0
        %436 = vmatmul.mubr.f32.gmra.mxu0 %v364
        %v437 = vpop.f32.mrf.mxu0
        %v438 = vadd.f32 0.0, %v437
        %v439 = vpop.f32.mrf.mxu0
        %440 = vdwg.mxu0
        %v441 = vld [vmem:[%s353] sm:$0x1]
        %v443 = vlaneseq
        %v444 = vshrl.u32 %v443, 7
        %v445 = vsub.s32 0, %v444
        %v446 = vrot.slane %v441, %v445
        %448 = vxpose.xlu0.b32.start [1/16] %v433, 128
        %449 = vxpose.xlu0.b32.cont [2/16] %v438, 128
        %450 = vxpose.xlu0.b32.cont [3/16] 0.0, 128
        %451 = vxpose.xlu0.b32.cont [4/16] 0.0, 128
        %452 = vxpose.xlu0.b32.cont [5/16] 0.0, 128
        %453 = vxpose.xlu0.b32.cont [6/16] 0.0, 128
        %454 = vxpose.xlu0.b32.cont [7/16] 0.0, 128
        %455 = vxpose.xlu0.b32.cont [8/16] 0.0, 128
        %456 = vxpose.xlu0.b32.cont [9/16] 0.0, 128
        %457 = vxpose.xlu0.b32.cont [10/16] 0.0, 128
        %458 = vxpose.xlu0.b32.cont [11/16] 0.0, 128
        %459 = vxpose.xlu0.b32.cont [12/16] 0.0, 128
        %460 = vxpose.xlu0.b32.cont [13/16] 0.0, 128
        %461 = vxpose.xlu0.b32.cont [14/16] 0.0, 128
        %462 = vxpose.xlu0.b32.cont [15/16] 0.0, 128
        %463 = vxpose.xlu0.b32.end [16/16] 0.0, 128
        %v464 = vpop.trf.xlu0
        %v465 = vpop.trf.xlu0
        %v466 = vpop.trf.xlu0
        %v467 = vpop.trf.xlu0
        %v468 = vpop.trf.xlu0
        %v469 = vpop.trf.xlu0
        %v470 = vpop.trf.xlu0
        %v471 = vpop.trf.xlu0
        %v472 = vpop.trf.xlu0
        %v473 = vpop.trf.xlu0
        %v474 = vpop.trf.xlu0
        %v475 = vpop.trf.xlu0
        %v476 = vpop.trf.xlu0
        %v477 = vpop.trf.xlu0
        %v478 = vpop.trf.xlu0
        %v479 = vpop.trf.xlu0
        %v481 = vsel %vm359, %v464, 0
        %v484 = vsel %vm359, %v465, 0
        %v487 = vsel %vm359, %v466, 0
        %v490 = vsel %vm359, %v467, 0
        %v493 = vsel %vm359, %v468, 0
        %v496 = vsel %vm359, %v469, 0
        %v499 = vsel %vm359, %v470, 0
        %v502 = vsel %vm359, %v471, 0
        %504 = vmatprep.subr.mxu0 0.0
        %505 = vmatpush1.msra.mxu0 0.0
        %506 = vmatprep.subr.mxu0 0.0
        %507 = vmatpush1.msra.mxu0 0.0
        %508 = vmatprep.subr.mxu0 0.0
        %509 = vmatpush1.msra.mxu0 0.0
        %510 = vmatprep.subr.mxu0 0.0
        %511 = vmatpush1.msra.mxu0 0.0
        %512 = vmatprep.subr.mxu0 0.0
        %513 = vmatpush1.msra.mxu0 0.0
        %514 = vmatprep.subr.mxu0 0.0
        %515 = vmatpush1.msra.mxu0 0.0
        %516 = vmatprep.subr.mxu0 0.0
        %517 = vmatpush1.msra.mxu0 0.0
        %518 = vmatprep.subr.mxu0 0.0
        %519 = vmatpush1.msra.mxu0 0.0
        %520 = vmatprep.subr.mxu0 0.0
        %521 = vmatpush1.msra.mxu0 0.0
        %522 = vmatprep.subr.mxu0 0.0
        %523 = vmatpush1.msra.mxu0 0.0
        %524 = vmatprep.subr.mxu0 0.0
        %525 = vmatpush1.msra.mxu0 0.0
        %526 = vmatprep.subr.mxu0 0.0
        %527 = vmatpush1.msra.mxu0 0.0
        %528 = vmatprep.subr.mxu0 0.0
        %529 = vmatpush1.msra.mxu0 0.0
        %530 = vmatprep.subr.mxu0 0.0
        %531 = vmatpush1.msra.mxu0 0.0
        %532 = vmatprep.subr.mxu0 0.0
        %533 = vmatpush1.msra.mxu0 %v356
        %534 = vmatprep.subr.mxu0 0.0
        %535 = vmatpush1.msra.mxu0 %v355
        %536 = vmatprep.subr.mxu0 0.0
        %537 = vmatpush2.msra.mxu0 0.0
        %538 = vmatprep.subr.mxu0 0.0
        %539 = vmatpush2.msra.mxu0 0.0
        %540 = vmatprep.subr.mxu0 0.0
        %541 = vmatpush2.msra.mxu0 0.0
        %542 = vmatprep.subr.mxu0 0.0
        %543 = vmatpush2.msra.mxu0 0.0
        %544 = vmatprep.subr.mxu0 0.0
        %545 = vmatpush2.msra.mxu0 0.0
        %546 = vmatprep.subr.mxu0 0.0
        %547 = vmatpush2.msra.mxu0 0.0
        %548 = vmatprep.subr.mxu0 0.0
        %549 = vmatpush2.msra.mxu0 0.0
        %550 = vmatprep.subr.mxu0 0.0
        %551 = vmatpush2.msra.mxu0 0.0
        %552 = vmatprep.subr.mxu0 0.0
        %553 = vmatpush2.msra.mxu0 0.0
        %554 = vmatprep.subr.mxu0 0.0
        %555 = vmatpush2.msra.mxu0 0.0
        %556 = vmatprep.subr.mxu0 0.0
        %557 = vmatpush2.msra.mxu0 0.0
        %558 = vmatprep.subr.mxu0 0.0
        %559 = vmatpush2.msra.mxu0 0.0
        %560 = vmatprep.subr.mxu0 0.0
        %561 = vmatpush2.msra.mxu0 0.0
        %562 = vmatprep.subr.mxu0 0.0
        %563 = vmatpush2.msra.mxu0 0.0
        %564 = vmatprep.subr.mxu0 0.0
        %565 = vmatpush2.msra.mxu0 0.0
        %566 = vmatprep.subr.mxu0 0.0
        %567 = vmatpush2.msra.mxu0 0.0
        %568 = vmatprep.mubr.f32.mxu0 0.0
        %569 = vmatmul.mubr.f32.gmra.mxu0 %v481
        %v570 = vpop.f32.mrf.mxu0
        %v571 = vadd.f32 %v446, %v570
        %v572 = vpop.f32.mrf.mxu0
        %573 = vmatprep.mubr.f32.mxu0 0.0
        %574 = vmatmul.mubr.f32.gmra.mxu0 %v484
        %v575 = vpop.f32.mrf.mxu0
        %v576 = vadd.f32 %v446, %v575
        %v577 = vpop.f32.mrf.mxu0
        %578 = vmatprep.mubr.f32.mxu0 0.0
        %579 = vmatmul.mubr.f32.gmra.mxu0 %v487
        %v580 = vpop.f32.mrf.mxu0
        %v581 = vadd.f32 %v446, %v580
        %v582 = vpop.f32.mrf.mxu0
        %583 = vmatprep.mubr.f32.mxu0 0.0
        %584 = vmatmul.mubr.f32.gmra.mxu0 %v490
        %v585 = vpop.f32.mrf.mxu0
        %v586 = vadd.f32 %v446, %v585
        %v587 = vpop.f32.mrf.mxu0
        %588 = vmatprep.mubr.f32.mxu0 0.0
        %589 = vmatmul.mubr.f32.gmra.mxu0 %v493
        %v590 = vpop.f32.mrf.mxu0
        %v591 = vadd.f32 %v446, %v590
        %v592 = vpop.f32.mrf.mxu0
        %593 = vmatprep.mubr.f32.mxu0 0.0
        %594 = vmatmul.mubr.f32.gmra.mxu0 %v496
        %v595 = vpop.f32.mrf.mxu0
        %v596 = vadd.f32 %v446, %v595
        %v597 = vpop.f32.mrf.mxu0
        %598 = vmatprep.mubr.f32.mxu0 0.0
        %599 = vmatmul.mubr.f32.gmra.mxu0 %v499
        %v600 = vpop.f32.mrf.mxu0
        %v601 = vadd.f32 %v446, %v600
        %v602 = vpop.f32.mrf.mxu0
        %603 = vmatprep.mubr.f32.mxu0 0.0
        %604 = vmatmul.mubr.f32.gmra.mxu0 %v502
        %v605 = vpop.f32.mrf.mxu0
        %v606 = vadd.f32 %v446, %v605
        %v607 = vpop.f32.mrf.mxu0
        %608 = vdwg.mxu0
        %vm609 = vcmask 523264
        %v610 = vsel %vm609, %v571, -inf
        %611 = vmax.xlane.f32.xlu0 %v610
        %v612 = vpop.xlane.xlu0 %611
        %v613 = vsel %vm609, %v576, -inf
        %614 = vmax.xlane.f32.xlu0 %v613
        %v615 = vpop.xlane.xlu0 %614
        %v616 = vsel %vm609, %v581, -inf
        %617 = vmax.xlane.f32.xlu0 %v616
        %v618 = vpop.xlane.xlu0 %617
        %v619 = vsel %vm609, %v586, -inf
        %620 = vmax.xlane.f32.xlu0 %v619
        %v621 = vpop.xlane.xlu0 %620
        %v622 = vsel %vm609, %v591, -inf
        %623 = vmax.xlane.f32.xlu0 %v622
        %v624 = vpop.xlane.xlu0 %623
        %v625 = vsel %vm609, %v596, -inf
        %626 = vmax.xlane.f32.xlu0 %v625
        %v627 = vpop.xlane.xlu0 %626
        %v628 = vsel %vm609, %v601, -inf
        %629 = vmax.xlane.f32.xlu0 %v628
        %v630 = vpop.xlane.xlu0 %629
        %v631 = vsel %vm609, %v606, -inf
        %632 = vmax.xlane.f32.xlu0 %v631
        %v633 = vpop.xlane.xlu0 %632
        %v634 = vsub.f32 %v571, %v612
        %v635 = vsub.f32 %v576, %v615
        %v636 = vsub.f32 %v581, %v618
        %v637 = vsub.f32 %v586, %v621
        %v638 = vsub.f32 %v591, %v624
        %v639 = vsub.f32 %v596, %v627
        %v640 = vsub.f32 %v601, %v630
        %v641 = vsub.f32 %v606, %v633
        %v642 = vmul.f32 %v634, 1.442695
        %v643 = vpow.pop %v642
        %v644 = vmul.f32 %v635, 1.442695
        %v645 = vpow.pop %v644
        %v646 = vmul.f32 %v636, 1.442695
        %v647 = vpow.pop %v646
        %v648 = vmul.f32 %v637, 1.442695
        %v649 = vpow.pop %v648
        %v650 = vmul.f32 %v638, 1.442695
        %v651 = vpow.pop %v650
        %v652 = vmul.f32 %v639, 1.442695
        %v653 = vpow.pop %v652
        %v654 = vmul.f32 %v640, 1.442695
        %v655 = vpow.pop %v654
        %v656 = vmul.f32 %v641, 1.442695
        %v657 = vpow.pop %v656
        %v658 = vsel %vm609, %v643, 0.0
        %659 = vadd.xlane.f32.xlu0 %v658
        %v660 = vpop.xlane.xlu0 %659
        %v661 = vsel %vm609, %v645, 0.0
        %662 = vadd.xlane.f32.xlu0 %v661
        %v663 = vpop.xlane.xlu0 %662
        %v664 = vsel %vm609, %v647, 0.0
        %665 = vadd.xlane.f32.xlu0 %v664
        %v666 = vpop.xlane.xlu0 %665
        %v667 = vsel %vm609, %v649, 0.0
        %668 = vadd.xlane.f32.xlu0 %v667
        %v669 = vpop.xlane.xlu0 %668
        %v670 = vsel %vm609, %v651, 0.0
        %671 = vadd.xlane.f32.xlu0 %v670
        %v672 = vpop.xlane.xlu0 %671
        %v673 = vsel %vm609, %v653, 0.0
        %674 = vadd.xlane.f32.xlu0 %v673
        %v675 = vpop.xlane.xlu0 %674
        %v676 = vsel %vm609, %v655, 0.0
        %677 = vadd.xlane.f32.xlu0 %v676
        %v678 = vpop.xlane.xlu0 %677
        %v679 = vsel %vm609, %v657, 0.0
        %680 = vadd.xlane.f32.xlu0 %v679
        %v681 = vpop.xlane.xlu0 %680
        %v682 = vrcp.pop %v660
        %v683 = vrcp.pop %v663
        %v684 = vrcp.pop %v666
        %v685 = vrcp.pop %v669
        %v686 = vrcp.pop %v672
        %v687 = vrcp.pop %v675
        %v688 = vrcp.pop %v678
        %v689 = vrcp.pop %v681
        %v690 = vmul.f32 %v643, %v682
        %v691 = vmul.f32 %v645, %v683
        %v692 = vmul.f32 %v647, %v684
        %v693 = vmul.f32 %v649, %v685
        %v694 = vmul.f32 %v651, %v686
        %v695 = vmul.f32 %v653, %v687
        %v696 = vmul.f32 %v655, %v688
        %v697 = vmul.f32 %v657, %v689
        %v699 = vsel %vm609, %v355, 0
        %v702 = vsel %vm609, %v356, 0
        %v705 = vsel %vm609, %v690, 0
        %v708 = vsel %vm609, %v691, 0
        %v711 = vsel %vm609, %v692, 0
        %v714 = vsel %vm609, %v693, 0
        %v717 = vsel %vm609, %v694, 0
        %v720 = vsel %vm609, %v695, 0
        %v723 = vsel %vm609, %v696, 0
        %v726 = vsel %vm609, %v697, 0
        %728 = vmatprep.subr.mxu0 0.0
        %729 = vmatpush1.xpose.msra.mxu0 0.0
        %730 = vmatprep.subr.mxu0 0.0
        %731 = vmatpush1.xpose.msra.mxu0 0.0
        %732 = vmatprep.subr.mxu0 0.0
        %733 = vmatpush1.xpose.msra.mxu0 0.0
        %734 = vmatprep.subr.mxu0 0.0
        %735 = vmatpush1.xpose.msra.mxu0 0.0
        %736 = vmatprep.subr.mxu0 0.0
        %737 = vmatpush1.xpose.msra.mxu0 0.0
        %738 = vmatprep.subr.mxu0 0.0
        %739 = vmatpush1.xpose.msra.mxu0 0.0
        %740 = vmatprep.subr.mxu0 0.0
        %741 = vmatpush1.xpose.msra.mxu0 0.0
        %742 = vmatprep.subr.mxu0 0.0
        %743 = vmatpush1.xpose.msra.mxu0 0.0
        %744 = vmatprep.subr.mxu0 0.0
        %745 = vmatpush1.xpose.msra.mxu0 %v726
        %746 = vmatprep.subr.mxu0 0.0
        %747 = vmatpush1.xpose.msra.mxu0 %v723
        %748 = vmatprep.subr.mxu0 0.0
        %749 = vmatpush1.xpose.msra.mxu0 %v720
        %750 = vmatprep.subr.mxu0 0.0
        %751 = vmatpush1.xpose.msra.mxu0 %v717
        %752 = vmatprep.subr.mxu0 0.0
        %753 = vmatpush1.xpose.msra.mxu0 %v714
        %754 = vmatprep.subr.mxu0 0.0
        %755 = vmatpush1.xpose.msra.mxu0 %v711
        %756 = vmatprep.subr.mxu0 0.0
        %757 = vmatpush1.xpose.msra.mxu0 %v708
        %758 = vmatprep.subr.mxu0 0.0
        %759 = vmatpush1.xpose.msra.mxu0 %v705
        %760 = vmatprep.subr.mxu0 0.0
        %761 = vmatpush2.xpose.msra.mxu0 0.0
        %762 = vmatprep.subr.mxu0 0.0
        %763 = vmatpush2.xpose.msra.mxu0 0.0
        %764 = vmatprep.subr.mxu0 0.0
        %765 = vmatpush2.xpose.msra.mxu0 0.0
        %766 = vmatprep.subr.mxu0 0.0
        %767 = vmatpush2.xpose.msra.mxu0 0.0
        %768 = vmatprep.subr.mxu0 0.0
        %769 = vmatpush2.xpose.msra.mxu0 0.0
        %770 = vmatprep.subr.mxu0 0.0
        %771 = vmatpush2.xpose.msra.mxu0 0.0
        %772 = vmatprep.subr.mxu0 0.0
        %773 = vmatpush2.xpose.msra.mxu0 0.0
        %774 = vmatprep.subr.mxu0 0.0
        %775 = vmatpush2.xpose.msra.mxu0 0.0
        %776 = vmatprep.subr.mxu0 0.0
        %777 = vmatpush2.xpose.msra.mxu0 0.0
        %778 = vmatprep.subr.mxu0 0.0
        %779 = vmatpush2.xpose.msra.mxu0 0.0
        %780 = vmatprep.subr.mxu0 0.0
        %781 = vmatpush2.xpose.msra.mxu0 0.0
        %782 = vmatprep.subr.mxu0 0.0
        %783 = vmatpush2.xpose.msra.mxu0 0.0
        %784 = vmatprep.subr.mxu0 0.0
        %785 = vmatpush2.xpose.msra.mxu0 0.0
        %786 = vmatprep.subr.mxu0 0.0
        %787 = vmatpush2.xpose.msra.mxu0 0.0
        %788 = vmatprep.subr.mxu0 0.0
        %789 = vmatpush2.xpose.msra.mxu0 0.0
        %790 = vmatprep.subr.mxu0 0.0
        %791 = vmatpush2.xpose.msra.mxu0 0.0
        %792 = vmatprep.mubr.f32.mxu0 0.0
        %793 = vmatmul.mubr.f32.gmra.mxu0 %v699
        %v794 = vpop.f32.mrf.mxu0
        %v795 = vadd.f32 0.0, %v794
        %v796 = vpop.f32.mrf.mxu0
        %797 = vmatprep.mubr.f32.mxu0 0.0
        %798 = vmatmul.mubr.f32.gmra.mxu0 %v702
        %v799 = vpop.f32.mrf.mxu0
        %v800 = vadd.f32 0.0, %v799
        %v801 = vpop.f32.mrf.mxu0
        %802 = vdwg.mxu0
        %v803 = vld [vmem:[#allocation6] sm:$0xff]
        %v804 = vld [vmem:[#allocation6 + $0x8] sm:$0xff]
        %v805 = vld [vmem:[%s4] sm:$0xff]
        %v806 = vld [vmem:[%s4 + $0x8] sm:$0xff]
        %808 = vset.pattern.permute.xlu0 0
        %809 = vperm.xlu0 %808, %v805
        %v810 = vpop.permute.xlu0 %809
        %813 = vset.pattern.permute.xlu0 0
        %814 = vperm.xlu0 %813, %v806
        %v815 = vpop.permute.xlu0 %814
        %v818 = vsel %vm359, %v803, 0
        %v821 = vsel %vm359, %v804, 0
        %823 = vmatprep.subr.mxu0 0.0
        %824 = vmatpush1.msra.mxu0 0.0
        %825 = vmatprep.subr.mxu0 0.0
        %826 = vmatpush1.msra.mxu0 0.0
        %827 = vmatprep.subr.mxu0 0.0
        %828 = vmatpush1.msra.mxu0 0.0
        %829 = vmatprep.subr.mxu0 0.0
        %830 = vmatpush1.msra.mxu0 0.0
        %831 = vmatprep.subr.mxu0 0.0
        %832 = vmatpush1.msra.mxu0 0.0
        %833 = vmatprep.subr.mxu0 0.0
        %834 = vmatpush1.msra.mxu0 0.0
        %835 = vmatprep.subr.mxu0 0.0
        %836 = vmatpush1.msra.mxu0 0.0
        %837 = vmatprep.subr.mxu0 0.0
        %838 = vmatpush1.msra.mxu0 0.0
        %839 = vmatprep.subr.mxu0 0.0
        %840 = vmatpush1.msra.mxu0 0.0
        %841 = vmatprep.subr.mxu0 0.0
        %842 = vmatpush1.msra.mxu0 0.0
        %843 = vmatprep.subr.mxu0 0.0
        %844 = vmatpush1.msra.mxu0 0.0
        %845 = vmatprep.subr.mxu0 0.0
        %846 = vmatpush1.msra.mxu0 0.0
        %847 = vmatprep.subr.mxu0 0.0
        %848 = vmatpush1.msra.mxu0 0.0
        %849 = vmatprep.subr.mxu0 0.0
        %850 = vmatpush1.msra.mxu0 0.0
        %851 = vmatprep.subr.mxu0 0.0
        %852 = vmatpush1.msra.mxu0 %v800
        %853 = vmatprep.subr.mxu0 0.0
        %854 = vmatpush1.msra.mxu0 %v795
        %855 = vmatprep.subr.mxu0 0.0
        %856 = vmatpush2.msra.mxu0 0.0
        %857 = vmatprep.subr.mxu0 0.0
        %858 = vmatpush2.msra.mxu0 0.0
        %859 = vmatprep.subr.mxu0 0.0
        %860 = vmatpush2.msra.mxu0 0.0
        %861 = vmatprep.subr.mxu0 0.0
        %862 = vmatpush2.msra.mxu0 0.0
        %863 = vmatprep.subr.mxu0 0.0
        %864 = vmatpush2.msra.mxu0 0.0
        %865 = vmatprep.subr.mxu0 0.0
        %866 = vmatpush2.msra.mxu0 0.0
        %867 = vmatprep.subr.mxu0 0.0
        %868 = vmatpush2.msra.mxu0 0.0
        %869 = vmatprep.subr.mxu0 0.0
        %870 = vmatpush2.msra.mxu0 0.0
        %871 = vmatprep.subr.mxu0 0.0
        %872 = vmatpush2.msra.mxu0 0.0
        %873 = vmatprep.subr.mxu0 0.0
        %874 = vmatpush2.msra.mxu0 0.0
        %875 = vmatprep.subr.mxu0 0.0
        %876 = vmatpush2.msra.mxu0 0.0
        %877 = vmatprep.subr.mxu0 0.0
        %878 = vmatpush2.msra.mxu0 0.0
        %879 = vmatprep.subr.mxu0 0.0
        %880 = vmatpush2.msra.mxu0 0.0
        %881 = vmatprep.subr.mxu0 0.0
        %882 = vmatpush2.msra.mxu0 0.0
        %883 = vmatprep.subr.mxu0 0.0
        %884 = vmatpush2.msra.mxu0 0.0
        %885 = vmatprep.subr.mxu0 0.0
        %886 = vmatpush2.msra.mxu0 0.0
        %887 = vmatprep.mubr.f32.mxu0 0.0
        %888 = vmatmul.mubr.f32.gmra.mxu0 %v818
        %v889 = vpop.f32.mrf.mxu0
        %v890 = vadd.f32 %v810, %v889
        %v891 = vpop.f32.mrf.mxu0
        %892 = vmatprep.mubr.f32.mxu0 0.0
        %893 = vmatmul.mubr.f32.gmra.mxu0 %v821
        %v894 = vpop.f32.mrf.mxu0
        %v895 = vadd.f32 %v815, %v894
        %v896 = vpop.f32.mrf.mxu0
        %897 = vdwg.mxu0
        %s898 = sld [smem:[#allocation2]]
        %v899 = vstv %s898
        %v900 = vmul.f32 %v899, %v890
        %v901 = vmul.f32 %v899, %v895
        %v902 = vadd.f32 %v900, %v355
        %v903 = vadd.f32 %v901, %v356
        %v904 = vmax.f32 %v902, 0.0
        %v905 = vmax.f32 %v903, 0.0
        %906 = vst.msk [vmem:[%s343] sm:$0xff] %vm609, %v904
        %907 = vst.msk [vmem:[%s343 + $0x8] sm:$0xff] %vm609, %v905
        %908 = vst.msk [vmem:[%s350] sm:$0xff] %vm609, %v690
        %909 = vst.msk [vmem:[%s350 + $0x8] sm:$0xff] %vm609, %v691
        %910 = vst.msk [vmem:[%s350 + $0x10] sm:$0xff] %vm609, %v692
        %911 = vst.msk [vmem:[%s350 + $0x18] sm:$0xff] %vm609, %v693
        %912 = vst.msk [vmem:[%s350 + $0x20] sm:$0xff] %vm609, %v694
        %913 = vst.msk [vmem:[%s350 + $0x28] sm:$0xff] %vm609, %v695
        %914 = vst.msk [vmem:[%s350 + $0x30] sm:$0xff] %vm609, %v696
        %915 = vst.msk [vmem:[%s350 + $0x38] sm:$0xff] %vm609, %v697
        %s916 = sand.u32 %s188, 1
        %s917 = scalar_lea.sflag [#allocation5], %s916
        %s918 = sand.u32 %s188, 1
        %s919 = smul.addr %s918, 16
        %s920 = scalar_lea.vmem [#allocation8], %s919
        %s921 = sand.u32 %s216, 1
        %s922 = scalar_lea.sflag [#allocation10], %s921
        %s923 = sand.u32 %s216, 1
        %s924 = smul.addr %s923, 64
        %s925 = scalar_lea.vmem [#allocation9], %s924
        // Predicated region
        $region53: #{tpu_custom_call.1} parent=43 // pred_check
          %p926 = pneg %p198
        $region54: #{tpu_custom_call.1} parent=43 // pred_check_branch
          %928 = sbr.rel (%p926) target = $region56
        $region55: #{tpu_custom_call.1} parent=43 // pred_region
          %s930 = ssub.s32 256, 256
          %931 = vsyncadd %s917, %s930
          %s932 = smul.addr %s34, 2
          %s933 = sadd.s32 %s35, %s932
          %s934 = smul.addr %s933, 128
          %s935 = scalar_lea.hbm %s6, %s934
          %s936 = sshll.u32 %s920, 4
          %s937 = int_to_ptr.vmem [resolvable:$true] %s936
          %942 = dma.vmem_to_hbm [thread:$0]  %s937, 256, %s935, %s917, 128, 128, 8
        $region56: #{tpu_custom_call.1} parent=43 // pred_fallthru
          _
        // Predicated region
        $region57: #{tpu_custom_call.1} parent=43 // pred_check
          %p943 = pneg %p226
        $region58: #{tpu_custom_call.1} parent=43 // pred_check_branch
          %945 = sbr.rel (%p943) target = $region60
        $region59: #{tpu_custom_call.1} parent=43 // pred_region
          %s946 = smul.u32 8, %s35
          %s948 = ssub.s32 1024, 1024
          %949 = vsyncadd %s922, %s948
          %s950 = smul.addr %s34, 8
          %s951 = sadd.s32 %s946, %s950
          %s952 = smul.addr %s951, 128
          %s953 = scalar_lea.hbm %s7, %s952
          %s954 = sshll.u32 %s925, 4
          %s955 = int_to_ptr.vmem [resolvable:$true] %s954
          %960 = dma.vmem_to_hbm [thread:$0]  %s955, 1024, %s953, %s922, 128, 128, 8
        $region60: #{tpu_custom_call.1} parent=43 // pred_fallthru
          _
      $region44: #{tpu_custom_call.1} parent=5 // pred_fallthru
        _
      %p961 = scmp.le.s32.totalorder 2, %s25
      // Predicated region
      $region61: #{tpu_custom_call.1} parent=5 // pred_check
        %p962 = pneg %p961
      $region62: #{tpu_custom_call.1} parent=5 // pred_check_branch
        %964 = sbr.rel (%p962) target = $region64
      $region63: #{tpu_custom_call.1} parent=5 // pred_region
        %s965 = ssub.s32 %s25, 2
        // Predicated region
        $region65: #{tpu_custom_call.1} parent=63 // pred_check
          %p966 = pneg %p204
        $region66: #{tpu_custom_call.1} parent=63 // pred_check_branch
          %968 = sbr.rel (%p966) target = $region68
        $region67: #{tpu_custom_call.1} parent=63 // pred_region
          %s969 = sand.u32 %s189, 1
          %s970 = scalar_lea.sflag [#allocation5], %s969
          %s971 = sand.u32 %s189, 1
          %s972 = smul.addr %s971, 16
          %s973 = scalar_lea.vmem [#allocation8], %s972
          %974 = dma.done %s970, 256
        $region68: #{tpu_custom_call.1} parent=63 // pred_fallthru
          _
        // Predicated region
        $region69: #{tpu_custom_call.1} parent=63 // pred_check
          %p975 = pneg %p232
        $region70: #{tpu_custom_call.1} parent=63 // pred_check_branch
          %977 = sbr.rel (%p975) target = $region72
        $region71: #{tpu_custom_call.1} parent=63 // pred_region
          %s978 = sand.u32 %s217, 1
          %s979 = scalar_lea.sflag [#allocation10], %s978
          %s980 = sand.u32 %s217, 1
          %s981 = smul.addr %s980, 64
          %s982 = scalar_lea.vmem [#allocation9], %s981
          %983 = dma.done %s979, 1024
        $region72: #{tpu_custom_call.1} parent=63 // pred_fallthru
          _
      $region64: #{tpu_custom_call.1} parent=5 // pred_fallthru
        _
    $region6: #{tpu_custom_call.1} parent=1 // loop_footer
      %s29 = sadd.s32 1, %s25
    $region7: #{tpu_custom_call.1} parent=1 // loop_footer_branch
      %24 = sbr.rel target = $region3
    $region8: #{tpu_custom_call.1} parent=1 // loop_exit
      _
    %984 = vsyncpa [#allocation4], 1
    %s985 = scalar_lea.sflag [#allocation4], 1
    %986 = vsyncpa %s985, 1
    %987 = vsyncpa [#allocation7], 1
    %988 = vsyncpa [#allocation5], 1
    %s989 = scalar_lea.sflag [#allocation5], 1
    %990 = vsyncpa %s989, 1
    %991 = vsyncpa [#allocation10], 1
    %s992 = scalar_lea.sflag [#allocation10], 1
    %993 = vsyncpa %s992, 1

</llo_original>
